<compile_context>
chip_gen: v7x
topology: tpu7x:2x2x1
jax: 0.10.0
libtpu: 0.0.40
codegen_flags: <defaults>
</compile_context>

<pallas_src>
import jax
import jax.numpy as jnp
from jax.experimental import pallas as pl
from jax.experimental.pallas import tpu as pltpu

HIDDEN = 32
_SUBLANE = 16      # safe row-tile granularity for f32 (8) and bf16 (16) packing
_MAX_TILE = 2048   # ~2-4 KB/row of padded f32 intermediates -> well under 16 MiB


# --------------------------------------------------------------------------- #
# Kernels
# --------------------------------------------------------------------------- #
def _softmax_store(logits, out_ref):
    # softmax(dim=1) with an exact divide (rows sum to 1 to f32 precision).
    m = jnp.max(logits, axis=1, keepdims=True)
    e = jnp.exp(logits - m)
    out_ref[...] = e / jnp.sum(e, axis=1, keepdims=True)


def _gconv_gru_h0_kernel(x_ref, w_x_ref, b_x_ref, w_lin_ref, b_lin_ref, out_ref):
    """Specialized path for H=None (H0 == 0): reset gate drops out entirely."""
    f32 = jnp.float32
    mx = w_x_ref.dtype
    # One MXU push gives both surviving gate pre-activations:
    #   (tile_n, F) @ (F, 2*HIDDEN) -> [z_pre | h~_pre]
    pre = (jnp.dot(x_ref[...].astype(mx), w_x_ref[...], preferred_element_type=f32)
           + b_x_ref[...])
    z = jax.nn.sigmoid(pre[:, :HIDDEN])
    h_tilde = jnp.tanh(pre[:, HIDDEN:])
    h = jnp.maximum((1.0 - z) * h_tilde, 0.0)          # H' = (1-Z)*H~ ; then ReLU
    logits = (jnp.dot(h.astype(w_lin_ref.dtype), w_lin_ref[...],
                      preferred_element_type=f32) + b_lin_ref[...])
    _softmax_store(logits, out_ref)


def _gconv_gru_h_kernel(x_ref, h_ref, w_x_ref, w_h_ref, b_g_ref, w_hh_ref,
                        w_lin_ref, b_lin_ref, out_ref):
    """General path: x and H arrive as separate f32 row tiles."""
    f32 = jnp.float32
    mx = w_x_ref.dtype
    h_prev = h_ref[...].astype(f32)                    # f32 carry, never quantized
    # Two MXU pushes (MXU is idle at these shapes, so the extra push is free):
    #   pre_x = x @ [Wz_x | Wr_x | Wh_x]   -> (tile_n, 96)
    #   pre_h = h @ [Wz_h | Wr_h]          -> (tile_n, 64)
    pre_x = jnp.dot(x_ref[...].astype(mx), w_x_ref[...], preferred_element_type=f32)
    pre_h = jnp.dot(h_prev.astype(mx), w_h_ref[...], preferred_element_type=f32)
    b_g = b_g_ref[...]
    # One lane-aligned sigmoid over the [z | r] block, then split.
    zr = jax.nn.sigmoid(pre_x[:, :2 * HIDDEN] + pre_h + b_g[:, :2 * HIDDEN])
    z = zr[:, :HIDDEN]
    r = zr[:, HIDDEN:]
    hr = (h_prev * r).astype(w_hh_ref.dtype)
    h_tilde = jnp.tanh(pre_x[:, 2 * HIDDEN:] + b_g[:, 2 * HIDDEN:]
                       + jnp.dot(hr, w_hh_ref[...], preferred_element_type=f32))
    h_new = z * h_prev + (1.0 - z) * h_tilde
    h = jnp.maximum(h_new, 0.0)
    logits = (jnp.dot(h.astype(w_lin_ref.dtype), w_lin_ref[...],
                      preferred_element_type=f32) + b_lin_ref[...])
    _softmax_store(logits, out_ref)


# --------------------------------------------------------------------------- #
# Wrapper
# --------------------------------------------------------------------------- #
def _round_up(v, m):
    return ((v + m - 1) // m) * m


def _pick_tile(n):
    # Big tiles amortize the ~0.35us per-grid-step overhead; at least 2 grid
    # steps so v7x can shard the "parallel" axis across its two TensorCores;
    # capped at 2048 rows (~2-4 KB/row of 128-lane-padded f32 intermediates),
    # which stays inside the conservative scoped-VMEM budget on v5e/v6e/v7x.
    n16 = _round_up(n, _SUBLANE)
    if n16 <= 2 * _SUBLANE:
        return n16
    half = _round_up(pl.cdiv(n16, 2), _SUBLANE)
    return min(half, _MAX_TILE)


def gconv_gru_forward(x, edge_index, edge_weight, params, H=None, *,
                      tile_n=None, use_bf16=True):
    """Fused GConvGRU(K=1) -> ReLU -> Linear -> softmax.

    edge_index / edge_weight are accepted for interface parity; with K=1 the
    ChebConv reduces to a dense linear map so they do not affect the output.
    Returns (softmax_probs, H) mirroring the PyTorch module (H unchanged).
    """
    del edge_index, edge_weight
    n, f = x.shape
    c = params["w_lin"].shape[1]
    p = params

    if tile_n is None:
        tile_n = _pick_tile(n)
    assert tile_n % _SUBLANE == 0, "tile_n must be a multiple of 16"
    n_pad = _round_up(n, tile_n)
    pad = n_pad - n
    grid = (n_pad // tile_n,)

    mx_dtype = jnp.bfloat16 if use_bf16 else jnp.float32
    wcast = lambda w: w.astype(mx_dtype)

    # Activations stay in native f32; only pad rows when N isn't tile-aligned.
    pad_rows = lambda a: a if pad == 0 else jnp.pad(a, ((0, pad), (0, 0)))
    full = lambda a: pl.BlockSpec(a.shape, lambda i: (0, 0))
    row_tiled = lambda cols: pl.BlockSpec((tile_n, cols), lambda i: (i, 0))

    w_lin = wcast(p["w_lin"])
    b_lin = p["b_lin"]                                   # biases stay f32

    if H is None:
        # H0 == 0: the z*H0 term and the whole reset gate vanish; only the
        # X-side weights of the update/candidate gates survive.
        w_x = wcast(jnp.concatenate([p["wz_x"], p["wh_x"]], axis=1))      # (F, 64)
        b_x = jnp.concatenate([p["bz"], p["bh"]], axis=1)                 # (1, 64)
        kernel = _gconv_gru_h0_kernel
        operands = (pad_rows(x), w_x, b_x, w_lin, b_lin)
        in_specs = [row_tiled(f), full(w_x), full(b_x), full(w_lin), full(b_lin)]
        flops = 2 * n_pad * (f * 2 * HIDDEN + HIDDEN * c)
        transcendentals = n_pad * (2 * HIDDEN + c)
    else:
        # Packed weights: pre_x uses [Wz_x | Wr_x | Wh_x], pre_h uses
        # [Wz_h | Wr_h]; the reset-scaled candidate term uses Wh_h alone.
        w_x = wcast(jnp.concatenate([p["wz_x"], p["wr_x"], p["wh_x"]], axis=1))  # (F, 96)
        w_h = wcast(jnp.concatenate([p["wz_h"], p["wr_h"]], axis=1))             # (32, 64)
        b_g = jnp.concatenate([p["bz"], p["br"], p["bh"]], axis=1)               # (1, 96)
        w_hh = wcast(p["wh_h"])
        kernel = _gconv_gru_h_kernel
        operands = (pad_rows(x), pad_rows(H.astype(jnp.float32)),
                    w_x, w_h, b_g, w_hh, w_lin, b_lin)
        in_specs = [row_tiled(f), row_tiled(HIDDEN), full(w_x), full(w_h),
                    full(b_g), full(w_hh), full(w_lin), full(b_lin)]
        flops = 2 * n_pad * (f * 3 * HIDDEN + HIDDEN * 2 * HIDDEN
                             + HIDDEN * HIDDEN + HIDDEN * c)
        transcendentals = n_pad * (3 * HIDDEN + c)

    bytes_accessed = int(sum(a.size * a.dtype.itemsize for a in operands)
                         + n_pad * c * 4)

    # Note: the (tile_n, C) output block is narrower than 128 lanes -> masked
    # stores; the output volume is tiny here so this is accepted.
    probs = pl.pallas_call(
        kernel,
        out_shape=jax.ShapeDtypeStruct((n_pad, c), jnp.float32),
        grid_spec=pltpu.PrefetchScalarGridSpec(
            num_scalar_prefetch=0,
            grid=grid,
            in_specs=in_specs,
            out_specs=row_tiled(c),
        ),
        compiler_params=pltpu.CompilerParams(
            dimension_semantics=("parallel",),
            vmem_limit_bytes=32 * 1024 * 1024),
        cost_estimate=pl.CostEstimate(
            flops=flops,
            transcendentals=transcendentals,
            bytes_accessed=bytes_accessed),
    )(*operands)
    out = probs if pad == 0 else probs[:n]
    return out, H


# --------------------------------------------------------------------------- #
# Parameters & reference
# --------------------------------------------------------------------------- #
def init_params(key, node_features, num_classes, hidden=HIDDEN):
    """Synthetic parameters with the shapes of GConvGRU(F, 32, K=1) + Linear.

    Each gate's bias combines the two ChebConv biases (bz = bz_x + bz_h, ...),
    which is mathematically identical for the summed-gate formulation.
    """
    keys = jax.random.split(key, 8)

    def glorot(k, shape):
        fan_in, fan_out = shape
        lim = (6.0 / (fan_in + fan_out)) ** 0.5
        return jax.random.uniform(k, shape, jnp.float32, -lim, lim)

    f, c = node_features, num_classes
    return dict(
        wz_x=glorot(keys[0], (f, hidden)), wz_h=glorot(keys[1], (hidden, hidden)),
        bz=jnp.full((1, hidden), 0.01, jnp.float32),
        wr_x=glorot(keys[2], (f, hidden)), wr_h=glorot(keys[3], (hidden, hidden)),
        br=jnp.full((1, hidden), 0.01, jnp.float32),
        wh_x=glorot(keys[4], (f, hidden)), wh_h=glorot(keys[5], (hidden, hidden)),
        bh=jnp.full((1, hidden), 0.01, jnp.float32),
        w_lin=glorot(keys[6], (hidden, c)),
        b_lin=jnp.full((1, c), 0.01, jnp.float32),
    )


def reference_forward(x, params, H=None):
    """Plain-JAX f32 reference (GConvGRU K=1 -> ReLU -> Linear -> softmax)."""
    n = x.shape[0]
    h0 = H if H is not None else jnp.zeros((n, HIDDEN), jnp.float32)
    p = params
    z = jax.nn.sigmoid(x @ p["wz_x"] + h0 @ p["wz_h"] + p["bz"])
    r = jax.nn.sigmoid(x @ p["wr_x"] + h0 @ p["wr_h"] + p["br"])
    ht = jnp.tanh(x @ p["wh_x"] + (h0 * r) @ p["wh_h"] + p["bh"])
    h_new = z * h0 + (1.0 - z) * ht
    logits = jax.nn.relu(h_new) @ p["w_lin"] + p["b_lin"]
    return jax.nn.softmax(logits, axis=1)


# --------------------------------------------------------------------------- #
# Self-test
# --------------------------------------------------------------------------- #
if __name__ == "__main__":
    N, F_IN, C = 50, 8, 4            # nodes, node_features, num_classes

    key = jax.random.PRNGKey(0)
    kx, kh, kp = jax.random.split(key, 3)

    x = jax.random.normal(kx, (N, F_IN), jnp.float32)
    # Dummy ring graph — interface parity only (numerically inert for K=1).
    edge_index = jnp.stack([jnp.arange(N), (jnp.arange(N) + 1) % N])
    edge_weight = jnp.ones((N,), jnp.float32)
    params = init_params(kp, F_IN, C)

    expected_h0 = reference_forward(x, params, H=None)

    # 1) Default path: H=None specialization, bf16 MXU operands, f32 gating,
    #    auto-picked tile (>=2 grid steps).
    probs, h_out = gconv_gru_forward(x, edge_index, edge_weight, params, H=None)
    probs = jax.block_until_ready(probs)
    assert probs.shape == (N, C)
    assert h_out is None
    assert jnp.allclose(jnp.sum(probs, axis=1), 1.0, atol=1e-3)
    assert jnp.allclose(probs, expected_h0, atol=2e-2), "bf16 H=None mismatch"

    # 2) f32 path with a forced multi-tile grid (exercises padding + tiling).
    probs32, _ = gconv_gru_forward(x, edge_index, edge_weight, params, H=None,
                                   tile_n=16, use_bf16=False)
    probs32 = jax.block_until_ready(probs32)
    assert jnp.allclose(probs32, expected_h0, atol=5e-3), "f32 H=None mismatch"

    # 3) General path with a provided hidden state (f32 carry, bf16 MXU).
    h_init = jax.random.normal(kh, (N, HIDDEN), jnp.float32)
    probs_h, h_ret = gconv_gru_forward(x, edge_index, edge_weight, params, H=h_init)
    probs_h = jax.block_until_ready(probs_h)
    expected_h = reference_forward(x, params, H=h_init)
    assert jnp.allclose(probs_h, expected_h, atol=2e-2), "bf16 H!=None mismatch"
    assert h_ret is h_init

    print("KERNEL_OK")
</pallas_src>

<mosaic_0001>
module attributes {stable_mosaic.version = 11 : i64} {
  func.func @_gconv_gru_h0_kernel(%arg0: i32, %arg1: memref<32x8xf32, #tpu.memory_space<vmem>>, %arg2: memref<8x64xbf16, #tpu.memory_space<vmem>>, %arg3: memref<1x64xf32, #tpu.memory_space<vmem>>, %arg4: memref<32x4xbf16, #tpu.memory_space<vmem>>, %arg5: memref<1x4xf32, #tpu.memory_space<vmem>>, %arg6: memref<32x4xf32, #tpu.memory_space<vmem>>) attributes {dimension_semantics = [#tpu.dimension_semantics<parallel>], iteration_bounds = array<i64: 2>, scalar_prefetch = 0 : i64, scratch_operands = 0 : i64, tpu.core_type = #tpu.core_type<tc>, window_params = [{transform_indices = @transform_0, window_bounds = array<i64: 32, 8>}, {pipeline_mode = #tpu.pipeline_mode<synchronous>, transform_indices = @transform_1, window_bounds = array<i64: 8, 64>}, {pipeline_mode = #tpu.pipeline_mode<synchronous>, transform_indices = @transform_2, window_bounds = array<i64: 1, 64>}, {pipeline_mode = #tpu.pipeline_mode<synchronous>, transform_indices = @transform_3, window_bounds = array<i64: 32, 4>}, {pipeline_mode = #tpu.pipeline_mode<synchronous>, transform_indices = @transform_4, window_bounds = array<i64: 1, 4>}, {transform_indices = @transform_5, window_bounds = array<i64: 32, 4>}]} {
    %c0 = arith.constant 0 : index
    %c0_0 = arith.constant 0 : index
    %0 = vector.load %arg1[%c0, %c0_0] : memref<32x8xf32, #tpu.memory_space<vmem>>, vector<32x8xf32>
    %1 = arith.truncf %0 : vector<32x8xf32> to vector<32x8xbf16>
    %c0_1 = arith.constant 0 : index
    %c0_2 = arith.constant 0 : index
    %2 = vector.load %arg2[%c0_1, %c0_2] : memref<8x64xbf16, #tpu.memory_space<vmem>>, vector<8x64xbf16>
    %cst = arith.constant dense<0.000000e+00> : vector<32x64xf32>
    %3 = tpu.matmul %1, %2, %cst {dimension_numbers = #tpu.dot_dimension_numbers<[1], [0], [0], [1], [0, 0, 1, 1], [], []>} : vector<32x8xbf16>, vector<8x64xbf16>, vector<32x64xf32> -> vector<32x64xf32>
    %c0_3 = arith.constant 0 : index
    %c0_4 = arith.constant 0 : index
    %4 = vector.load %arg3[%c0_3, %c0_4] : memref<1x64xf32, #tpu.memory_space<vmem>>, vector<1x64xf32>
    %5 = vector.broadcast %4 : vector<1x64xf32> to vector<32x64xf32>
    %6 = arith.addf %3, %5 : vector<32x64xf32>
    %7 = vector.extract_strided_slice %6 {offsets = [0, 0], sizes = [32, 32], strides = [1, 1]} : vector<32x64xf32> to vector<32x32xf32>
    %8 = arith.negf %7 : vector<32x32xf32>
    %9 = math.exp %8 : vector<32x32xf32>
    %cst_5 = arith.constant 1.000000e+00 : f32
    %10 = vector.broadcast %cst_5 : f32 to vector<32x32xf32>
    %11 = arith.addf %10, %9 : vector<32x32xf32>
    %12 = arith.divf %10, %11 : vector<32x32xf32>
    %13 = vector.extract_strided_slice %6 {offsets = [0, 32], sizes = [32, 32], strides = [1, 1]} : vector<32x64xf32> to vector<32x32xf32>
    %14 = math.tanh %13 : vector<32x32xf32>
    %cst_6 = arith.constant 1.000000e+00 : f32
    %15 = vector.broadcast %cst_6 : f32 to vector<32x32xf32>
    %16 = arith.subf %15, %12 : vector<32x32xf32>
    %17 = arith.mulf %16, %14 : vector<32x32xf32>
    %cst_7 = arith.constant 0.000000e+00 : f32
    %18 = vector.broadcast %cst_7 : f32 to vector<32x32xf32>
    %19 = arith.maximumf %17, %18 : vector<32x32xf32>
    %20 = arith.truncf %19 : vector<32x32xf32> to vector<32x32xbf16>
    %c0_8 = arith.constant 0 : index
    %c0_9 = arith.constant 0 : index
    %21 = vector.load %arg4[%c0_8, %c0_9] : memref<32x4xbf16, #tpu.memory_space<vmem>>, vector<32x4xbf16>
    %cst_10 = arith.constant dense<0.000000e+00> : vector<32x4xf32>
    %22 = tpu.matmul %20, %21, %cst_10 {dimension_numbers = #tpu.dot_dimension_numbers<[1], [0], [0], [1], [0, 0, 1, 1], [], []>} : vector<32x32xbf16>, vector<32x4xbf16>, vector<32x4xf32> -> vector<32x4xf32>
    %c0_11 = arith.constant 0 : index
    %c0_12 = arith.constant 0 : index
    %23 = vector.load %arg5[%c0_11, %c0_12] : memref<1x4xf32, #tpu.memory_space<vmem>>, vector<1x4xf32>
    %24 = vector.broadcast %23 : vector<1x4xf32> to vector<32x4xf32>
    %25 = arith.addf %22, %24 : vector<32x4xf32>
    %cst_13 = arith.constant dense<0xFF800000> : vector<32xf32>
    %26 = vector.multi_reduction <maximumf>, %25, %cst_13 [1] : vector<32x4xf32> to vector<32xf32>
    %27 = vector.shape_cast %26 : vector<32xf32> to vector<32x1xf32>
    %28 = vector.broadcast %27 : vector<32x1xf32> to vector<32x4xf32>
    %29 = arith.subf %25, %28 : vector<32x4xf32>
    %30 = math.exp %29 : vector<32x4xf32>
    %cst_14 = arith.constant dense<0.000000e+00> : vector<32xf32>
    %31 = vector.multi_reduction <add>, %30, %cst_14 [1] : vector<32x4xf32> to vector<32xf32>
    %32 = vector.shape_cast %31 : vector<32xf32> to vector<32x1xf32>
    %33 = vector.broadcast %32 : vector<32x1xf32> to vector<32x4xf32>
    %34 = arith.divf %30, %33 : vector<32x4xf32>
    %c0_15 = arith.constant 0 : index
    %c0_16 = arith.constant 0 : index
    %35 = vector.load %arg6[%c0_15, %c0_16] : memref<32x4xf32, #tpu.memory_space<vmem>>, vector<32x4xf32>
    tpu.vector_store %arg6[%c0_15, %c0_16], %34 {strides = array<i32>} : memref<32x4xf32, #tpu.memory_space<vmem>>, vector<32x4xf32>,
    return
  }
  func.func @transform_0(%arg0: i32) -> (i32, i32) {
    %c0_i32 = arith.constant 0 : i32
    %c0_i32_0 = arith.constant 0 : i32
    return %arg0, %c0_i32 : i32, i32
  }
  func.func @transform_1(%arg0: i32) -> (i32, i32) {
    %c0_i32 = arith.constant 0 : i32
    %c0_i32_0 = arith.constant 0 : i32
    %c0_i32_1 = arith.constant 0 : i32
    return %c0_i32, %c0_i32_0 : i32, i32
  }
  func.func @transform_2(%arg0: i32) -> (i32, i32) {
    %c0_i32 = arith.constant 0 : i32
    %c0_i32_0 = arith.constant 0 : i32
    %c0_i32_1 = arith.constant 0 : i32
    return %c0_i32, %c0_i32_0 : i32, i32
  }
  func.func @transform_3(%arg0: i32) -> (i32, i32) {
    %c0_i32 = arith.constant 0 : i32
    %c0_i32_0 = arith.constant 0 : i32
    %c0_i32_1 = arith.constant 0 : i32
    return %c0_i32, %c0_i32_0 : i32, i32
  }
  func.func @transform_4(%arg0: i32) -> (i32, i32) {
    %c0_i32 = arith.constant 0 : i32
    %c0_i32_0 = arith.constant 0 : i32
    %c0_i32_1 = arith.constant 0 : i32
    return %c0_i32, %c0_i32_0 : i32, i32
  }
  func.func @transform_5(%arg0: i32) -> (i32, i32) {
    %c0_i32 = arith.constant 0 : i32
    %c0_i32_0 = arith.constant 0 : i32
    return %arg0, %c0_i32 : i32, i32
  }
}

</mosaic_0001>

<llo_original>
// kernel: tpu_custom_call.1
$region0: #{tpu_custom_call.1}
  #allocation0 [shape = 'u32[]', space=smem, size = 0x4, offset = 0x4, fixed_abs, tag = 'smem constant byte address 0x4 - core index']
  #allocation1 [shape = 'u32[144,128]{1,0:T(1,128)}', space=vmem, size = 0x12000, scoped, tag = 'internal scratch']
  %s0 = inlined_call_operand.vmem [shape: f32[64,8], index: 0, kind: input, shape index: {}]
  %s1 = inlined_call_operand.vmem [shape: bf16[8,64], index: 1, kind: input, shape index: {}]
  %s2 = inlined_call_operand.vmem [shape: f32[1,64], index: 2, kind: input, shape index: {}]
  %s3 = inlined_call_operand.vmem [shape: bf16[32,4], index: 3, kind: input, shape index: {}]
  %s4 = inlined_call_operand.vmem [shape: f32[1,4], index: 4, kind: input, shape index: {}]
  %s5 = inlined_call_operand.vmem [shape: f32[64,4], index: 5, kind: output, shape index: {}]
  %s6 = sld [smem:[#allocation0]]
  $region53: #{tpu_custom_call.1} parent=0
    _
  %s8 = ssub.s32 1, %s6
  %s9 = scalar_select 0, %s8, %s6
  loop: start=0, step=1, limit=4
  $region2: #{tpu_custom_call.1} parent=0 // loop_pre_header
    _
  $region3: #{tpu_custom_call.1} parent=0 // loop_header
    %s11 = sphi 0, %s15
    %p12 = scmp.ge.s32.totalorder %s11, 4
    %s21 = sphi 0, %s23
    %s24 = sphi 0, %s21
    %s25 = sphi 0, %s24
    %s41 = sphi 0, %s25
    %s45 = sphi 0, %s45
    %s47 = sphi 0, %s45
    %s48 = sphi 0, %s47
    %s62 = sphi 0, %s48
    %s66 = sphi 0, %s66
    %s68 = sphi 0, %s66
    %s69 = sphi 0, %s68
    %s83 = sphi 0, %s69
    %s87 = sphi 0, %s87
    %s89 = sphi 0, %s87
    %s90 = sphi 0, %s89
    %s104 = sphi 0, %s90
    %s108 = sphi 0, %s108
    %s110 = sphi 0, %s108
    %s111 = sphi 0, %s110
    %s125 = sphi 0, %s111
    %s131 = sphi 0, %s133
    %s134 = sphi 0, %s131
    %s135 = sphi 0, %s134
    %s151 = sphi 0, %s135
  $region4: #{tpu_custom_call.1} parent=0 // loop_header_branch
    %14 = sbr.rel (%p12) target = $region8
  $region5: #{tpu_custom_call.1} parent=0 // loop_body
    %s16 = ssub.s32 %s11, 1
    %s17 = ssub.s32 %s11, 2
    %s18 = sadd.s32 %s11, 1
    %s19 = ssub.s32 %s11, %s18
    %p20 = scmp.eq.s32.totalorder %s19, 0
    %s22 = sadd.s32 %s21, 1
    %s23 = scalar_select %p20, %s21, %s22
    %p26 = pneg %p20
    %p27 = scmp.eq.s32.totalorder %s11, 1
    %p28 = por %p26, %p27
    %p29 = scmp.ne.s32.totalorder %s21, %s24
    %p30 = scmp.eq.s32.totalorder %s11, 0
    %p31 = por %p29, %p30
    %p32 = scmp.ne.s32.totalorder %s21, %s24
    %p33 = scmp.eq.s32.totalorder %s16, 1
    %p34 = por %p32, %p33
    %p35 = scmp.ne.s32.totalorder %s24, %s25
    %p36 = scmp.eq.s32.totalorder %s16, 0
    %p37 = por %p35, %p36
    %p38 = scmp.ne.s32.totalorder %s24, %s25
    %p39 = scmp.eq.s32.totalorder %s17, 1
    %p40 = por %p38, %p39
    %p42 = scmp.ne.s32.totalorder %s25, %s41
    %p43 = scmp.eq.s32.totalorder %s17, 0
    %p44 = por %p42, %p43
    %s46 = sadd.s32 %s45, 1
    %p49 = scmp.eq.s32.totalorder %s11, 1
    %p50 = scmp.ne.s32.totalorder %s45, %s47
    %p51 = scmp.eq.s32.totalorder %s11, 0
    %p52 = por %p50, %p51
    %p53 = scmp.ne.s32.totalorder %s45, %s47
    %p54 = scmp.eq.s32.totalorder %s16, 1
    %p55 = por %p53, %p54
    %p56 = scmp.ne.s32.totalorder %s47, %s48
    %p57 = scmp.eq.s32.totalorder %s16, 0
    %p58 = por %p56, %p57
    %p59 = scmp.ne.s32.totalorder %s47, %s48
    %p60 = scmp.eq.s32.totalorder %s17, 1
    %p61 = por %p59, %p60
    %p63 = scmp.ne.s32.totalorder %s48, %s62
    %p64 = scmp.eq.s32.totalorder %s17, 0
    %p65 = por %p63, %p64
    %s67 = sadd.s32 %s66, 1
    %p70 = scmp.eq.s32.totalorder %s11, 1
    %p71 = scmp.ne.s32.totalorder %s66, %s68
    %p72 = scmp.eq.s32.totalorder %s11, 0
    %p73 = por %p71, %p72
    %p74 = scmp.ne.s32.totalorder %s66, %s68
    %p75 = scmp.eq.s32.totalorder %s16, 1
    %p76 = por %p74, %p75
    %p77 = scmp.ne.s32.totalorder %s68, %s69
    %p78 = scmp.eq.s32.totalorder %s16, 0
    %p79 = por %p77, %p78
    %p80 = scmp.ne.s32.totalorder %s68, %s69
    %p81 = scmp.eq.s32.totalorder %s17, 1
    %p82 = por %p80, %p81
    %p84 = scmp.ne.s32.totalorder %s69, %s83
    %p85 = scmp.eq.s32.totalorder %s17, 0
    %p86 = por %p84, %p85
    %s88 = sadd.s32 %s87, 1
    %p91 = scmp.eq.s32.totalorder %s11, 1
    %p92 = scmp.ne.s32.totalorder %s87, %s89
    %p93 = scmp.eq.s32.totalorder %s11, 0
    %p94 = por %p92, %p93
    %p95 = scmp.ne.s32.totalorder %s87, %s89
    %p96 = scmp.eq.s32.totalorder %s16, 1
    %p97 = por %p95, %p96
    %p98 = scmp.ne.s32.totalorder %s89, %s90
    %p99 = scmp.eq.s32.totalorder %s16, 0
    %p100 = por %p98, %p99
    %p101 = scmp.ne.s32.totalorder %s89, %s90
    %p102 = scmp.eq.s32.totalorder %s17, 1
    %p103 = por %p101, %p102
    %p105 = scmp.ne.s32.totalorder %s90, %s104
    %p106 = scmp.eq.s32.totalorder %s17, 0
    %p107 = por %p105, %p106
    %s109 = sadd.s32 %s108, 1
    %p112 = scmp.eq.s32.totalorder %s11, 1
    %p113 = scmp.ne.s32.totalorder %s108, %s110
    %p114 = scmp.eq.s32.totalorder %s11, 0
    %p115 = por %p113, %p114
    %p116 = scmp.ne.s32.totalorder %s108, %s110
    %p117 = scmp.eq.s32.totalorder %s16, 1
    %p118 = por %p116, %p117
    %p119 = scmp.ne.s32.totalorder %s110, %s111
    %p120 = scmp.eq.s32.totalorder %s16, 0
    %p121 = por %p119, %p120
    %p122 = scmp.ne.s32.totalorder %s110, %s111
    %p123 = scmp.eq.s32.totalorder %s17, 1
    %p124 = por %p122, %p123
    %p126 = scmp.ne.s32.totalorder %s111, %s125
    %p127 = scmp.eq.s32.totalorder %s17, 0
    %p128 = por %p126, %p127
    %s129 = ssub.s32 %s11, %s18
    %p130 = scmp.eq.s32.totalorder %s129, 0
    %s132 = sadd.s32 %s131, 1
    %s133 = scalar_select %p130, %s131, %s132
    %p136 = pneg %p130
    %p137 = scmp.eq.s32.totalorder %s11, 1
    %p138 = por %p136, %p137
    %p139 = scmp.ne.s32.totalorder %s131, %s134
    %p140 = scmp.eq.s32.totalorder %s11, 0
    %p141 = por %p139, %p140
    %p142 = scmp.ne.s32.totalorder %s131, %s134
    %p143 = scmp.eq.s32.totalorder %s16, 1
    %p144 = por %p142, %p143
    %p145 = scmp.ne.s32.totalorder %s134, %s135
    %p146 = scmp.eq.s32.totalorder %s16, 0
    %p147 = por %p145, %p146
    %p148 = scmp.ne.s32.totalorder %s134, %s135
    %p149 = scmp.eq.s32.totalorder %s17, 1
    %p150 = por %p148, %p149
    %p152 = scmp.ne.s32.totalorder %s135, %s151
    %p153 = scmp.eq.s32.totalorder %s17, 0
    %p154 = por %p152, %p153
    %p155 = scmp.le.s32.totalorder 1, %s11
    %p156 = scmp.lt.s32.totalorder %s11, 3
    %p157 = pnand %p155, %p156
    %p158 = pneg %p157
    // Predicated region
    $region9: #{tpu_custom_call.1} parent=5 // pred_check
      _
    $region10: #{tpu_custom_call.1} parent=5 // pred_check_branch
      %160 = sbr.rel (%p157) target = $region12
    $region11: #{tpu_custom_call.1} parent=5 // pred_region
      %s161 = ssub.s32 %s11, 1
      // Predicated region
      $region13: #{tpu_custom_call.1} parent=11 // pred_check
        %p162 = pneg %p58
      $region14: #{tpu_custom_call.1} parent=11 // pred_check_branch
        %164 = sbr.rel (%p162) target = $region16
      $region15: #{tpu_custom_call.1} parent=11 // pred_region
        _
      $region16: #{tpu_custom_call.1} parent=11 // pred_fallthru
        _
      // Predicated region
      $region17: #{tpu_custom_call.1} parent=11 // pred_check
        %p165 = pneg %p79
      $region18: #{tpu_custom_call.1} parent=11 // pred_check_branch
        %167 = sbr.rel (%p165) target = $region20
      $region19: #{tpu_custom_call.1} parent=11 // pred_region
        _
      $region20: #{tpu_custom_call.1} parent=11 // pred_fallthru
        _
      // Predicated region
      $region21: #{tpu_custom_call.1} parent=11 // pred_check
        %p168 = pneg %p100
      $region22: #{tpu_custom_call.1} parent=11 // pred_check_branch
        %170 = sbr.rel (%p168) target = $region24
      $region23: #{tpu_custom_call.1} parent=11 // pred_region
        _
      $region24: #{tpu_custom_call.1} parent=11 // pred_fallthru
        _
      // Predicated region
      $region25: #{tpu_custom_call.1} parent=11 // pred_check
        %p171 = pneg %p121
      $region26: #{tpu_custom_call.1} parent=11 // pred_check_branch
        %173 = sbr.rel (%p171) target = $region28
      $region27: #{tpu_custom_call.1} parent=11 // pred_region
        _
      $region28: #{tpu_custom_call.1} parent=11 // pred_fallthru
        _
    $region12: #{tpu_custom_call.1} parent=5 // pred_fallthru
      _
    %p174 = scmp.lt.s32.totalorder %s11, 2
    // Predicated region
    $region29: #{tpu_custom_call.1} parent=5 // pred_check
      %p175 = pneg %p174
    $region30: #{tpu_custom_call.1} parent=5 // pred_check_branch
      %177 = sbr.rel (%p175) target = $region32
    $region31: #{tpu_custom_call.1} parent=5 // pred_region
      // Predicated region
      $region33: #{tpu_custom_call.1} parent=31 // pred_check
        %p178 = pneg %p31
      $region34: #{tpu_custom_call.1} parent=31 // pred_check_branch
        %180 = sbr.rel (%p178) target = $region36
      $region35: #{tpu_custom_call.1} parent=31 // pred_region
        %s181 = smul.u32 4, %s11
        %p182 = scmp.lt.s32.totalorder %s181, 7
        %s183 = scalar_select %p182, %s181, 7
        %s184 = smul.addr %s183, 8
        %s185 = scalar_lea.vmem %s0, %s184
        %s186 = smul.u32 4, %s11
      $region36: #{tpu_custom_call.1} parent=31 // pred_fallthru
        _
    $region32: #{tpu_custom_call.1} parent=5 // pred_fallthru
      _
    %p187 = scmp.le.s32.totalorder 1, %s11
    %p188 = scmp.lt.s32.totalorder %s11, 3
    %p189 = pnand %p187, %p188
    %p190 = pneg %p189
    // Predicated region
    $region37: #{tpu_custom_call.1} parent=5 // pred_check
      _
    $region38: #{tpu_custom_call.1} parent=5 // pred_check_branch
      %192 = sbr.rel (%p189) target = $region40
    $region39: #{tpu_custom_call.1} parent=5 // pred_region
      %s193 = ssub.s32 %s11, 1
      %s194 = smul.u32 4, %s16
      %p195 = scmp.lt.s32.totalorder %s194, 7
      %s196 = scalar_select %p195, %s194, 7
      %s197 = smul.addr %s196, 8
      %s198 = scalar_lea.vmem %s0, %s197
      %p199 = pneg %p37
      %p200 = pneg %p34
      %p201 = pneg %p58
      %p202 = pneg %p55
      %p203 = pneg %p79
      %p204 = pneg %p76
      %p205 = pneg %p100
      %p206 = pneg %p97
      %p207 = pneg %p121
      %p208 = pneg %p118
      %p209 = pneg %p147
      %p210 = pneg %p144
      %s211 = smul.u32 4, %s16
      %p212 = scmp.lt.s32.totalorder %s211, 7
      %s213 = scalar_select %p212, %s211, 7
      %s214 = smul.addr %s213, 8
      %s215 = scalar_lea.vmem %s5, %s214
      %s216 = smul.u32 4, %s16
      %p217 = scmp.lt.s32.totalorder %s216, 7
      %s218 = scalar_select %p217, %s216, 7
      %s219 = smul.addr %s218, 8
      %s220 = scalar_lea.vmem %s0, %s219
      %s221 = smul.u32 4, %s16
      %s222 = smul.u32 4, %s16
      %p223 = scmp.lt.s32.totalorder %s222, 7
      %s224 = scalar_select %p223, %s222, 7
      %s225 = smul.addr %s224, 8
      %s226 = scalar_lea.vmem %s5, %s225
      %s227 = smul.u32 4, %s16
      %v229 = vld [vmem:[%s220] sm:$0xff]
      %v230 = vld [vmem:[%s220 + $0x8] sm:$0xff]
      %v231 = vld [vmem:[%s220 + $0x10] sm:$0xff]
      %v232 = vld [vmem:[%s220 + $0x18] sm:$0xff]
      %v233 = vpack.c.bf16 %v230, %v229
      %v234 = vpack.c.bf16 %v232, %v231
      %v235 = vld [vmem:[%s1] sm:$0xf]
      %v236 = vld [vmem:[%s2] sm:$0x1]
      %v238 = vlaneseq
      %v239 = vshrl.u32 %v238, 7
      %v240 = vsub.s32 0, %v239
      %v241 = vrot.slane %v236, %v240
      %vm243 = vcmask 64512
      %v245 = vsel %vm243, %v233, 0
      %v248 = vsel %vm243, %v234, 0
      %vm250 = vcmask 1043456
      %v252 = vsel %vm250, %v235, 0
      %254 = vmatprep.subr.bf16.mxu0 0
      %255 = vmatpush1.bf16.msra.mxu0 %v252
      %256 = vmatprep.subr.bf16.mxu0 0
      %257 = vmatpush1.bf16.msra.mxu0 0
      %258 = vmatprep.subr.bf16.mxu0 0
      %259 = vmatpush1.bf16.msra.mxu0 0
      %260 = vmatprep.subr.bf16.mxu0 0
      %261 = vmatpush1.bf16.msra.mxu0 0
      %262 = vmatprep.subr.bf16.mxu0 0
      %263 = vmatpush1.bf16.msra.mxu0 0
      %264 = vmatprep.subr.bf16.mxu0 0
      %265 = vmatpush1.bf16.msra.mxu0 0
      %266 = vmatprep.subr.bf16.mxu0 0
      %267 = vmatpush1.bf16.msra.mxu0 0
      %268 = vmatprep.subr.bf16.mxu0 0
      %269 = vmatpush1.bf16.msra.mxu0 0
      %270 = vmatprep.subr.bf16.mxu0 0
      %271 = vmatpush1.bf16.msra.mxu0 0
      %272 = vmatprep.subr.bf16.mxu0 0
      %273 = vmatpush1.bf16.msra.mxu0 0
      %274 = vmatprep.subr.bf16.mxu0 0
      %275 = vmatpush1.bf16.msra.mxu0 0
      %276 = vmatprep.subr.bf16.mxu0 0
      %277 = vmatpush1.bf16.msra.mxu0 0
      %278 = vmatprep.subr.bf16.mxu0 0
      %279 = vmatpush1.bf16.msra.mxu0 0
      %280 = vmatprep.subr.bf16.mxu0 0
      %281 = vmatpush1.bf16.msra.mxu0 0
      %282 = vmatprep.subr.bf16.mxu0 0
      %283 = vmatpush1.bf16.msra.mxu0 0
      %284 = vmatprep.subr.bf16.mxu0 0
      %285 = vmatpush1.bf16.msra.mxu0 0
      %286 = vmatprep.mubr.bf16.mxu0 0
      %287 = vmatmul.mubr.bf16.gmra.mrb[0].mxu0 %v245
      %v288 = vpop.f32.mrb[0].mxu0
      %v289 = vadd.f32 %v241, %v288
      %v290 = vpop.f32.mrb[0].mxu0
      %v291 = vpop.f32.mrb[0].mxu0
      %v292 = vadd.f32 %v241, %v291
      %v293 = vpop.f32.mrb[0].mxu0
      %294 = vmatprep.mubr.bf16.mxu0 0
      %295 = vmatmul.mubr.bf16.gmra.mrb[0].mxu0 %v248
      %v296 = vpop.f32.mrb[0].mxu0
      %v297 = vadd.f32 %v241, %v296
      %v298 = vpop.f32.mrb[0].mxu0
      %v299 = vpop.f32.mrb[0].mxu0
      %v300 = vadd.f32 %v241, %v299
      %v301 = vpop.f32.mrb[0].mxu0
      %302 = vdwg.mxu0
      %v303 = vxor.u32 %v289, 2147483648
      %v304 = vxor.u32 %v292, 2147483648
      %v305 = vxor.u32 %v297, 2147483648
      %v306 = vxor.u32 %v300, 2147483648
      %v307 = vmul.f32 %v303, 1.442695
      %v308 = vpow.pop %v307
      %v309 = vmul.f32 %v304, 1.442695
      %v310 = vpow.pop %v309
      %v311 = vmul.f32 %v305, 1.442695
      %v312 = vpow.pop %v311
      %v313 = vmul.f32 %v306, 1.442695
      %v314 = vpow.pop %v313
      %v315 = vadd.f32 %v308, 1.0
      %v316 = vadd.f32 %v310, 1.0
      %v317 = vadd.f32 %v312, 1.0
      %v318 = vadd.f32 %v314, 1.0
      %v319 = vrcp.pop %v315
      %v320 = vmul.f32 1.0, %v319
      %v321 = vrcp.pop %v316
      %v322 = vmul.f32 1.0, %v321
      %v323 = vrcp.pop %v317
      %v324 = vmul.f32 1.0, %v323
      %v325 = vrcp.pop %v318
      %v326 = vmul.f32 1.0, %v325
      %v327 = vtanh.pop %v289
      %v328 = vtanh.pop %v292
      %v329 = vtanh.pop %v297
      %v330 = vtanh.pop %v300
      %v331 = vsub.f32 1.0, %v320
      %v332 = vsub.f32 1.0, %v322
      %v333 = vsub.f32 1.0, %v324
      %v334 = vsub.f32 1.0, %v326
      %339 = vrot.lane.b32.xlu0 %v327, 96
      %v340 = vpop.permute.xlu0 %339
      %341 = vrot.lane.b32.xlu0 %v328, 96
      %v342 = vpop.permute.xlu0 %341
      %343 = vrot.lane.b32.xlu0 %v329, 96
      %v344 = vpop.permute.xlu0 %343
      %345 = vrot.lane.b32.xlu0 %v330, 96
      %v346 = vpop.permute.xlu0 %345
      %v351 = vmul.f32 %v331, %v340
      %v352 = vmul.f32 %v332, %v342
      %v353 = vmul.f32 %v333, %v344
      %v354 = vmul.f32 %v334, %v346
      %v355 = vmax.f32 %v351, 0.0
      %v356 = vmax.f32 %v352, 0.0
      %v357 = vmax.f32 %v353, 0.0
      %v358 = vmax.f32 %v354, 0.0
      %v359 = vpack.c.bf16 %v356, %v355
      %v360 = vpack.c.bf16 %v358, %v357
      %v361 = vld [vmem:[%s3] sm:$0xf]
      %v362 = vld [vmem:[%s3 + $0x4] sm:$0xf]
      %v363 = vld [vmem:[%s3 + $0x8] sm:$0xf]
      %v364 = vld [vmem:[%s3 + $0xc] sm:$0xf]
      %v365 = vld [vmem:[%s4] sm:$0x1]
      %v367 = vlaneseq
      %v368 = vshrl.u32 %v367, 7
      %v369 = vsub.s32 0, %v368
      %v370 = vrot.slane %v365, %v369
      %v376 = vunpack.c.l.b16 %v361
      %v377 = vunpack.c.l.b16 %v362
      %v378 = vunpack.c.l.b16 %v363
      %v379 = vunpack.c.l.b16 %v364
      %v380 = vpack.c.b16 %v377, %v376
      %v381 = vpack.c.b16 %v379, %v378
      %vm384 = vcmask 261120
      %v386 = vsel %vm384, %v359, 0
      %v389 = vsel %vm384, %v360, 0
      %391 = vmatprep.subr.bf16.mxu0 0
      %392 = vmatpush1.bf16.msra.mxu0 %v380
      %393 = vmatprep.subr.bf16.mxu0 0
      %394 = vmatpush1.bf16.msra.mxu0 %v381
      %395 = vmatprep.subr.bf16.mxu0 0
      %396 = vmatpush1.bf16.msra.mxu0 0
      %397 = vmatprep.subr.bf16.mxu0 0
      %398 = vmatpush1.bf16.msra.mxu0 0
      %399 = vmatprep.subr.bf16.mxu0 0
      %400 = vmatpush1.bf16.msra.mxu0 0
      %401 = vmatprep.subr.bf16.mxu0 0
      %402 = vmatpush1.bf16.msra.mxu0 0
      %403 = vmatprep.subr.bf16.mxu0 0
      %404 = vmatpush1.bf16.msra.mxu0 0
      %405 = vmatprep.subr.bf16.mxu0 0
      %406 = vmatpush1.bf16.msra.mxu0 0
      %407 = vmatprep.subr.bf16.mxu0 0
      %408 = vmatpush1.bf16.msra.mxu0 0
      %409 = vmatprep.subr.bf16.mxu0 0
      %410 = vmatpush1.bf16.msra.mxu0 0
      %411 = vmatprep.subr.bf16.mxu0 0
      %412 = vmatpush1.bf16.msra.mxu0 0
      %413 = vmatprep.subr.bf16.mxu0 0
      %414 = vmatpush1.bf16.msra.mxu0 0
      %415 = vmatprep.subr.bf16.mxu0 0
      %416 = vmatpush1.bf16.msra.mxu0 0
      %417 = vmatprep.subr.bf16.mxu0 0
      %418 = vmatpush1.bf16.msra.mxu0 0
      %419 = vmatprep.subr.bf16.mxu0 0
      %420 = vmatpush1.bf16.msra.mxu0 0
      %421 = vmatprep.subr.bf16.mxu0 0
      %422 = vmatpush1.bf16.msra.mxu0 0
      %423 = vmatprep.mubr.bf16.mxu0 0
      %424 = vmatmul.mubr.bf16.gmra.mrb[0].mxu0 %v386
      %v425 = vpop.f32.mrb[0].mxu0
      %v426 = vadd.f32 %v370, %v425
      %v427 = vpop.f32.mrb[0].mxu0
      %v428 = vpop.f32.mrb[0].mxu0
      %v429 = vadd.f32 %v370, %v428
      %v430 = vpop.f32.mrb[0].mxu0
      %431 = vmatprep.mubr.bf16.mxu0 0
      %432 = vmatmul.mubr.bf16.gmra.mrb[0].mxu0 %v389
      %v433 = vpop.f32.mrb[0].mxu0
      %v434 = vadd.f32 %v370, %v433
      %v435 = vpop.f32.mrb[0].mxu0
      %v436 = vpop.f32.mrb[0].mxu0
      %v437 = vadd.f32 %v370, %v436
      %v438 = vpop.f32.mrb[0].mxu0
      %439 = vdwg.mxu0
      %vm440 = vcmask 31744
      %v441 = vsel %vm440, %v426, -inf
      %442 = vmax.xlane.f32.xlu0 %v441
      %v443 = vpop.xlane.xlu0 %442
      %v444 = vsel %vm440, %v429, -inf
      %445 = vmax.xlane.f32.xlu0 %v444
      %v446 = vpop.xlane.xlu0 %445
      %v447 = vsel %vm440, %v434, -inf
      %448 = vmax.xlane.f32.xlu0 %v447
      %v449 = vpop.xlane.xlu0 %448
      %v450 = vsel %vm440, %v437, -inf
      %451 = vmax.xlane.f32.xlu0 %v450
      %v452 = vpop.xlane.xlu0 %451
      %v453 = vsub.f32 %v426, %v443
      %v454 = vsub.f32 %v429, %v446
      %v455 = vsub.f32 %v434, %v449
      %v456 = vsub.f32 %v437, %v452
      %v457 = vmul.f32 %v453, 1.442695
      %v458 = vpow.pop %v457
      %v459 = vmul.f32 %v454, 1.442695
      %v460 = vpow.pop %v459
      %v461 = vmul.f32 %v455, 1.442695
      %v462 = vpow.pop %v461
      %v463 = vmul.f32 %v456, 1.442695
      %v464 = vpow.pop %v463
      %v465 = vsel %vm440, %v458, 0.0
      %466 = vadd.xlane.f32.xlu0 %v465
      %v467 = vpop.xlane.xlu0 %466
      %v468 = vsel %vm440, %v460, 0.0
      %469 = vadd.xlane.f32.xlu0 %v468
      %v470 = vpop.xlane.xlu0 %469
      %v471 = vsel %vm440, %v462, 0.0
      %472 = vadd.xlane.f32.xlu0 %v471
      %v473 = vpop.xlane.xlu0 %472
      %v474 = vsel %vm440, %v464, 0.0
      %475 = vadd.xlane.f32.xlu0 %v474
      %v476 = vpop.xlane.xlu0 %475
      %v477 = vrcp.pop %v467
      %v478 = vmul.f32 %v458, %v477
      %v479 = vrcp.pop %v470
      %v480 = vmul.f32 %v460, %v479
      %v481 = vrcp.pop %v473
      %v482 = vmul.f32 %v462, %v481
      %v483 = vrcp.pop %v476
      %v484 = vmul.f32 %v464, %v483
      %485 = vst.msk [vmem:[%s226] sm:$0xff] %vm440, %v478
      %486 = vst.msk [vmem:[%s226 + $0x8] sm:$0xff] %vm440, %v480
      %487 = vst.msk [vmem:[%s226 + $0x10] sm:$0xff] %vm440, %v482
      %488 = vst.msk [vmem:[%s226 + $0x18] sm:$0xff] %vm440, %v484
      %s489 = smul.u32 4, %s16
      %p490 = scmp.lt.s32.totalorder %s489, 7
      %s491 = scalar_select %p490, %s489, 7
      %s492 = smul.addr %s491, 8
      %s493 = scalar_lea.vmem %s5, %s492
      // Predicated region
      $region41: #{tpu_custom_call.1} parent=39 // pred_check
        %p494 = pneg %p144
      $region42: #{tpu_custom_call.1} parent=39 // pred_check_branch
        %496 = sbr.rel (%p494) target = $region44
      $region43: #{tpu_custom_call.1} parent=39 // pred_region
        %s497 = smul.u32 4, %s16
      $region44: #{tpu_custom_call.1} parent=39 // pred_fallthru
        _
    $region40: #{tpu_custom_call.1} parent=5 // pred_fallthru
      _
    %p498 = scmp.le.s32.totalorder 2, %s11
    // Predicated region
    $region45: #{tpu_custom_call.1} parent=5 // pred_check
      %p499 = pneg %p498
    $region46: #{tpu_custom_call.1} parent=5 // pred_check_branch
      %501 = sbr.rel (%p499) target = $region48
    $region47: #{tpu_custom_call.1} parent=5 // pred_region
      %s502 = ssub.s32 %s11, 2
      // Predicated region
      $region49: #{tpu_custom_call.1} parent=47 // pred_check
        %p503 = pneg %p150
      $region50: #{tpu_custom_call.1} parent=47 // pred_check_branch
        %505 = sbr.rel (%p503) target = $region52
      $region51: #{tpu_custom_call.1} parent=47 // pred_region
        %s506 = smul.u32 4, %s17
        %p507 = scmp.lt.s32.totalorder %s506, 7
        %s508 = scalar_select %p507, %s506, 7
        %s509 = smul.addr %s508, 8
        %s510 = scalar_lea.vmem %s5, %s509
      $region52: #{tpu_custom_call.1} parent=47 // pred_fallthru
        _
    $region48: #{tpu_custom_call.1} parent=5 // pred_fallthru
      _
  $region6: #{tpu_custom_call.1} parent=0 // loop_footer
    %s15 = sadd.s32 1, %s11
  $region7: #{tpu_custom_call.1} parent=0 // loop_footer_branch
    %10 = sbr.rel target = $region3
  $region8: #{tpu_custom_call.1} parent=0 // loop_exit
    _

</llo_original>
